<compile_context>
chip_gen: v5e
topology: v5e:2x2
jax: 0.10.0
libtpu: 0.0.40
codegen_flags: <defaults>
</compile_context>

<pallas_src>
import functools
import math

import jax
import jax.numpy as jnp
from jax.experimental import pallas as pl
from jax.experimental.pallas import tpu as pltpu

LANE = 128


def _round_up(n, m):
    return ((n + m - 1) // m) * m


def _sage_transform_kernel(x_ref, w_ref, b_ref, h_ref, s_ref, *, fp_out):
    """z = x @ [W_l | W_r]; h = bf16(z_l) feeds A@h, s = z_r + b is the self term."""
    z = jnp.dot(x_ref[...], w_ref[...], preferred_element_type=jnp.float32)
    h_ref[...] = z[:, :fp_out].astype(h_ref.dtype)
    s_ref[...] = z[:, fp_out:] + b_ref[...]


def _sage_agg_kernel(a_ref, h_ref, s_ref, o_ref, acc_ref, *, mode, fout):
    """Tiled acc += A @ h over the k (neighbor) axis; epilogue adds self term."""
    k = pl.program_id(1)

    @pl.when(k == 0)
    def _():
        acc_ref[...] = jnp.zeros_like(acc_ref)

    acc_ref[...] += jnp.dot(a_ref[...], h_ref[...],
                            preferred_element_type=jnp.float32)

    @pl.when(k == pl.num_programs(1) - 1)
    def _():
        out = acc_ref[...] + s_ref[...]
        if mode == "relu":
            out = jnp.maximum(out, 0.0)
        elif mode == "log_softmax":
            # mask padded lanes out of the softmax reduction
            lane = jax.lax.broadcasted_iota(jnp.int32, out.shape, 1)
            valid = lane < fout
            neg_inf = jnp.full_like(out, -jnp.inf)
            m = jnp.max(jnp.where(valid, out, neg_inf), axis=-1, keepdims=True)
            shifted = out - m
            p = jnp.where(valid, jnp.exp(shifted), 0.0)
            lse = jnp.log(jnp.sum(p, axis=-1, keepdims=True))
            out = shifted - lse
        o_ref[...] = out.astype(o_ref.dtype)


def sage_conv(a_bf16, x_pad, w_cat, b_pad, *, fout, mode, tm, tk):
    """One SAGEConv layer: transform kernel + tiled aggregation kernel."""
    n_pad, fp_in = x_pad.shape
    fp_out = b_pad.shape[1]

    # --- transform: z = x @ [W_l | W_r] + [0 | b], split into (h, s) ---------
    h, s = pl.pallas_call(
        functools.partial(_sage_transform_kernel, fp_out=fp_out),
        out_shape=(
            jax.ShapeDtypeStruct((n_pad, fp_out), jnp.bfloat16),
            jax.ShapeDtypeStruct((n_pad, fp_out), jnp.float32),
        ),
        grid_spec=pltpu.PrefetchScalarGridSpec(
            num_scalar_prefetch=0,
            grid=(n_pad // tm,),
            in_specs=[
                pl.BlockSpec((tm, fp_in), lambda i: (i, 0)),
                pl.BlockSpec((fp_in, 2 * fp_out), lambda i: (0, 0)),
                pl.BlockSpec((1, fp_out), lambda i: (0, 0)),
            ],
            out_specs=[
                pl.BlockSpec((tm, fp_out), lambda i: (i, 0)),
                pl.BlockSpec((tm, fp_out), lambda i: (i, 0)),
            ],
        ),
        compiler_params=pltpu.CompilerParams(
            dimension_semantics=("parallel",)),
    )(x_pad, w_cat, b_pad)

    # --- aggregation: out = A @ h + s, tiled over (rows, neighbors) ----------
    out = pl.pallas_call(
        functools.partial(_sage_agg_kernel, mode=mode, fout=fout),
        out_shape=jax.ShapeDtypeStruct((n_pad, fp_out), jnp.float32),
        grid_spec=pltpu.PrefetchScalarGridSpec(
            num_scalar_prefetch=0,
            grid=(n_pad // tm, n_pad // tk),
            in_specs=[
                pl.BlockSpec((tm, tk), lambda i, k: (i, k)),
                pl.BlockSpec((tk, fp_out), lambda i, k: (k, 0)),
                pl.BlockSpec((tm, fp_out), lambda i, k: (i, 0)),
            ],
            out_specs=pl.BlockSpec((tm, fp_out), lambda i, k: (i, 0)),
            scratch_shapes=[pltpu.VMEM((tm, fp_out), jnp.float32)],
        ),
        compiler_params=pltpu.CompilerParams(
            dimension_semantics=("parallel", "arbitrary"),
            vmem_limit_bytes=48 * 1024 * 1024),
    )(a_bf16, h, s)
    return out


def init_sage_params(key, in_channels, hidden_channels, out_channels, num_layers):
    """Glorot-uniform init; each layer has (W_l, W_r, b) like PyG SAGEConv.

    W_l: applied to aggregated neighbor features (lin_l, has bias b).
    W_r: applied to the node's own features (lin_r, no bias).
    Stored as (Fin, Fout) so the kernels do x @ W.
    """
    dims = [in_channels] + [hidden_channels] * (num_layers - 1) + [out_channels]
    params = []
    for i in range(num_layers):
        fin, fout = dims[i], dims[i + 1]
        key, k1, k2 = jax.random.split(key, 3)
        limit = (6.0 / (fin + fout)) ** 0.5
        w_l = jax.random.uniform(k1, (fin, fout), jnp.float32, -limit, limit)
        w_r = jax.random.uniform(k2, (fin, fout), jnp.float32, -limit, limit)
        b = jnp.zeros((fout,), jnp.float32)
        params.append((w_l, w_r, b))
    return params


def _pad_params(params):
    """Concatenate [W_l | W_r] along the output dim and pad to 128 lanes."""
    padded = []
    for w_l, w_r, b in params:
        fin, fout = w_l.shape
        fp_in = _round_up(fin, LANE)
        fp_out = _round_up(fout, LANE)
        w_cat = jnp.zeros((fp_in, 2 * fp_out), jnp.float32)
        w_cat = w_cat.at[:fin, :fout].set(w_l)
        w_cat = w_cat.at[:fin, fp_out:fp_out + fout].set(w_r)
        b_pad = jnp.zeros((1, fp_out), jnp.float32).at[0, :fout].set(b)
        padded.append((w_cat, b_pad, fout))
    return padded


def sage_forward(x, adj_mean, params, *, tm=128, tk=512):
    """SAGE.forward: conv->relu->dropout(eval=identity) ... conv->log_softmax."""
    n, fin = x.shape
    out_channels = params[-1][0].shape[1]

    tm = min(tm, _round_up(n, LANE))
    tk = min(tk, _round_up(n, LANE))
    n_pad = _round_up(n, math.lcm(tm, tk))
    fp_in0 = _round_up(fin, LANE)

    x_pad = jnp.zeros((n_pad, fp_in0), jnp.float32).at[:n, :fin].set(x)
    a_pad = jnp.zeros((n_pad, n_pad), jnp.float32).at[:n, :n].set(adj_mean)
    a_bf16 = a_pad.astype(jnp.bfloat16)  # halves the dominant N^2 HBM stream

    padded = _pad_params(params)
    h = x_pad
    for li, (w_cat, b_pad, fout) in enumerate(padded):
        mode = "relu" if li < len(padded) - 1 else "log_softmax"
        h = sage_conv(a_bf16, h, w_cat, b_pad, fout=fout, mode=mode, tm=tm, tk=tk)
        # dropout (p=0.5) in eval mode is the identity
    return h[:n, :out_channels]


def sage_forward_ref(x, adj_mean, params):
    """Pure-JAX reference with the same dtype choices as the kernels."""
    a = adj_mean.astype(jnp.bfloat16)
    h_x = x
    hp = jax.lax.Precision.HIGHEST
    for li, (w_l, w_r, b) in enumerate(params):
        hl = jnp.dot(h_x, w_l, precision=hp).astype(jnp.bfloat16)
        agg = jnp.dot(a, hl, preferred_element_type=jnp.float32)
        out = agg + jnp.dot(h_x, w_r, precision=hp) + b
        if li < len(params) - 1:
            h_x = jnp.maximum(out, 0.0)
        else:
            return jax.nn.log_softmax(out, axis=-1)


if __name__ == "__main__":
    key = jax.random.PRNGKey(0)

    # small synthetic graph
    num_nodes = 200
    in_channels = 16
    hidden_channels = 32
    out_channels = 8
    num_layers = 3

    key, k_x, k_adj, k_p = jax.random.split(key, 4)
    x = jax.random.normal(k_x, (num_nodes, in_channels), jnp.float32)

    # random binary adjacency -> row-normalized dense matrix (mean aggregation)
    adj = (jax.random.uniform(k_adj, (num_nodes, num_nodes)) < 0.15).astype(jnp.float32)
    deg = jnp.sum(adj, axis=1, keepdims=True)
    adj_mean = adj / jnp.maximum(deg, 1.0)

    params = init_sage_params(k_p, in_channels, hidden_channels, out_channels,
                              num_layers)

    # tm=tk=128 -> N padded to 256, aggregation grid (2, 2): exercises both the
    # parallel row axis and the k-reduction accumulator.  For large graphs use
    # the defaults (tk=512) so per-step overhead amortizes over bigger A tiles.
    out = sage_forward(x, adj_mean, params, tm=128, tk=128)
    out = jax.block_until_ready(out)

    ref = sage_forward_ref(x, adj_mean, params)

    assert out.shape == (num_nodes, out_channels)
    # log_softmax rows should sum (in prob space) to ~1
    row_sums = jnp.sum(jnp.exp(out), axis=-1)
    assert bool(jnp.all(jnp.abs(row_sums - 1.0) < 1e-3))
    # kernel matches the pure-JAX reference
    assert bool(jnp.allclose(out, ref, atol=3e-2, rtol=3e-2))

    print("KERNEL_OK")
</pallas_src>

<mosaic_0001>
module attributes {stable_mosaic.version = 11 : i64} {
  func.func @_sage_transform_kernel(%arg0: i32, %arg1: memref<128x128xf32, #tpu.memory_space<vmem>>, %arg2: memref<128x256xf32, #tpu.memory_space<vmem>>, %arg3: memref<1x128xf32, #tpu.memory_space<vmem>>, %arg4: memref<128x128xbf16, #tpu.memory_space<vmem>>, %arg5: memref<128x128xf32, #tpu.memory_space<vmem>>) attributes {dimension_semantics = [#tpu.dimension_semantics<parallel>], iteration_bounds = array<i64: 2>, scalar_prefetch = 0 : i64, scratch_operands = 0 : i64, tpu.core_type = #tpu.core_type<tc>, window_params = [{transform_indices = @transform_0, window_bounds = array<i64: 128, 128>}, {pipeline_mode = #tpu.pipeline_mode<synchronous>, transform_indices = @transform_1, window_bounds = array<i64: 128, 256>}, {pipeline_mode = #tpu.pipeline_mode<synchronous>, transform_indices = @transform_2, window_bounds = array<i64: 1, 128>}, {transform_indices = @transform_3, window_bounds = array<i64: 128, 128>}, {transform_indices = @transform_4, window_bounds = array<i64: 128, 128>}]} {
    %c0 = arith.constant 0 : index
    %c0_0 = arith.constant 0 : index
    %0 = vector.load %arg1[%c0, %c0_0] : memref<128x128xf32, #tpu.memory_space<vmem>>, vector<128x128xf32>
    %c0_1 = arith.constant 0 : index
    %c0_2 = arith.constant 0 : index
    %1 = vector.load %arg2[%c0_1, %c0_2] : memref<128x256xf32, #tpu.memory_space<vmem>>, vector<128x256xf32>
    %cst = arith.constant dense<0.000000e+00> : vector<128x256xf32>
    %2 = tpu.matmul %0, %1, %cst {dimension_numbers = #tpu.dot_dimension_numbers<[1], [0], [0], [1], [0, 0, 1, 1], [], []>} : vector<128x128xf32>, vector<128x256xf32>, vector<128x256xf32> -> vector<128x256xf32>
    %3 = vector.extract_strided_slice %2 {offsets = [0, 0], sizes = [128, 128], strides = [1, 1]} : vector<128x256xf32> to vector<128x128xf32>
    %4 = arith.truncf %3 : vector<128x128xf32> to vector<128x128xbf16>
    %c0_3 = arith.constant 0 : index
    %c0_4 = arith.constant 0 : index
    %5 = vector.load %arg4[%c0_3, %c0_4] : memref<128x128xbf16, #tpu.memory_space<vmem>>, vector<128x128xbf16>
    tpu.vector_store %arg4[%c0_3, %c0_4], %4 {strides = array<i32>} : memref<128x128xbf16, #tpu.memory_space<vmem>>, vector<128x128xbf16>,
    %6 = vector.extract_strided_slice %2 {offsets = [0, 128], sizes = [128, 128], strides = [1, 1]} : vector<128x256xf32> to vector<128x128xf32>
    %c0_5 = arith.constant 0 : index
    %c0_6 = arith.constant 0 : index
    %7 = vector.load %arg3[%c0_5, %c0_6] : memref<1x128xf32, #tpu.memory_space<vmem>>, vector<1x128xf32>
    %8 = vector.broadcast %7 : vector<1x128xf32> to vector<128x128xf32>
    %9 = arith.addf %6, %8 : vector<128x128xf32>
    %c0_7 = arith.constant 0 : index
    %c0_8 = arith.constant 0 : index
    %10 = vector.load %arg5[%c0_7, %c0_8] : memref<128x128xf32, #tpu.memory_space<vmem>>, vector<128x128xf32>
    tpu.vector_store %arg5[%c0_7, %c0_8], %9 {strides = array<i32>} : memref<128x128xf32, #tpu.memory_space<vmem>>, vector<128x128xf32>,
    return
  }
  func.func @transform_0(%arg0: i32) -> (i32, i32) {
    %c0_i32 = arith.constant 0 : i32
    %c0_i32_0 = arith.constant 0 : i32
    return %arg0, %c0_i32 : i32, i32
  }
  func.func @transform_1(%arg0: i32) -> (i32, i32) {
    %c0_i32 = arith.constant 0 : i32
    %c0_i32_0 = arith.constant 0 : i32
    %c0_i32_1 = arith.constant 0 : i32
    return %c0_i32, %c0_i32_0 : i32, i32
  }
  func.func @transform_2(%arg0: i32) -> (i32, i32) {
    %c0_i32 = arith.constant 0 : i32
    %c0_i32_0 = arith.constant 0 : i32
    %c0_i32_1 = arith.constant 0 : i32
    return %c0_i32, %c0_i32_0 : i32, i32
  }
  func.func @transform_3(%arg0: i32) -> (i32, i32) {
    %c0_i32 = arith.constant 0 : i32
    %c0_i32_0 = arith.constant 0 : i32
    return %arg0, %c0_i32 : i32, i32
  }
  func.func @transform_4(%arg0: i32) -> (i32, i32) {
    %c0_i32 = arith.constant 0 : i32
    %c0_i32_0 = arith.constant 0 : i32
    return %arg0, %c0_i32 : i32, i32
  }
}

</mosaic_0001>

<llo_original>
// kernel: tpu_custom_call.1
$region0: #{tpu_custom_call.1}
  #allocation0 [shape = 'u32[]', space=smem, size = 0x4, offset = 0x4, fixed_abs, tag = 'smem constant byte address 0x4 - core index']
  #allocation1 [shape = 'u32[72,128]{1,0:T(1,128)}', space=vmem, size = 0x9000, scoped, tag = 'internal scratch']
  %s0 = inlined_call_operand.hbm [shape: f32[256,128], index: 0, kind: input, shape index: {}]
  %s1 = inlined_call_operand.hbm [shape: f32[128,256], index: 1, kind: input, shape index: {}]
  %s2 = inlined_call_operand.vmem [shape: f32[1,128], index: 2, kind: input, shape index: {}]
  %s3 = inlined_call_operand.hbm [shape: bf16[256,128], index: 3, kind: output, shape index: {0}]
  %s4 = inlined_call_operand.hbm [shape: f32[256,128], index: 4, kind: output, shape index: {1}]
  %5 = xla_tuple %s3, %s4
  %s6 = sld [smem:[#allocation0]]
  $region61: #{tpu_custom_call.1} parent=0
    _
  %s8 = ssub.s32 1, %s6
  %s9 = scalar_select 0, %s8, %s6
  $region1: #{tpu_custom_call.1} parent=0
    #allocation2 [shape = 'u8[131072]{0}', space=vmem, size = 0x20000, scoped, tag = 'input window, operand 0']
    #allocation3 [shape = 's32[2]{0}', space=sflag, size = 0x8, scoped, tag = 'scoped memory for tpu_custom_call.1']
    #allocation4 [shape = 's32[2]{0}', space=sflag, size = 0x8, scoped, tag = 'scoped memory for tpu_custom_call.1']
    #allocation5 [shape = 'u8[131072]{0}', space=vmem, size = 0x20000, scoped, tag = 'input window, operand 1, single buffered']
    #allocation6 [shape = 's32[1]{0}', space=sflag, size = 0x4, scoped, tag = 'scoped memory for tpu_custom_call.1']
    #allocation7 [shape = 'u8[65536]{0}', space=vmem, size = 0x10000, scoped, tag = 'output window, operand 0']
    #allocation8 [shape = 'u8[131072]{0}', space=vmem, size = 0x20000, scoped, tag = 'output window, operand 1']
    #allocation9 [shape = 's32[2]{0}', space=sflag, size = 0x8, scoped, tag = 'scoped memory for tpu_custom_call.1']
    %10 = vsyncpa [#allocation3], 0
    %s11 = scalar_lea.sflag [#allocation3], 1
    %12 = vsyncpa %s11, 0
    %13 = vsyncpa [#allocation6], 0
    %14 = vsyncpa [#allocation4], 0
    %s15 = scalar_lea.sflag [#allocation4], 1
    %16 = vsyncpa %s15, 0
    %17 = vsyncpa [#allocation9], 0
    %s18 = scalar_lea.sflag [#allocation9], 1
    %19 = vsyncpa %s18, 0
    loop: start=0, step=1, limit=4
    $region2: #{tpu_custom_call.1} parent=1 // loop_pre_header
      _
    $region3: #{tpu_custom_call.1} parent=1 // loop_header
      %s21 = sphi 0, %s25
      %p22 = scmp.ge.s32.totalorder %s21, 4
      %s31 = sphi 0, %s33
      %s34 = sphi 0, %s31
      %s35 = sphi 0, %s34
      %s51 = sphi 0, %s35
      %s55 = sphi 0, %s55
      %s57 = sphi 0, %s55
      %s58 = sphi 0, %s57
      %s72 = sphi 0, %s58
      %s76 = sphi 0, %s76
      %s78 = sphi 0, %s76
      %s79 = sphi 0, %s78
      %s93 = sphi 0, %s79
      %s99 = sphi 0, %s101
      %s102 = sphi 0, %s99
      %s103 = sphi 0, %s102
      %s119 = sphi 0, %s103
      %s125 = sphi 0, %s127
      %s128 = sphi 0, %s125
      %s129 = sphi 0, %s128
      %s145 = sphi 0, %s129
    $region4: #{tpu_custom_call.1} parent=1 // loop_header_branch
      %24 = sbr.rel (%p22) target = $region8
    $region5: #{tpu_custom_call.1} parent=1 // loop_body
      %s26 = ssub.s32 %s21, 1
      %s27 = ssub.s32 %s21, 2
      %s28 = sadd.s32 %s21, 1
      %s29 = ssub.s32 %s21, %s28
      %p30 = scmp.eq.s32.totalorder %s29, 0
      %s32 = sadd.s32 %s31, 1
      %s33 = scalar_select %p30, %s31, %s32
      %p36 = pneg %p30
      %p37 = scmp.eq.s32.totalorder %s21, 1
      %p38 = por %p36, %p37
      %p39 = scmp.ne.s32.totalorder %s31, %s34
      %p40 = scmp.eq.s32.totalorder %s21, 0
      %p41 = por %p39, %p40
      %p42 = scmp.ne.s32.totalorder %s31, %s34
      %p43 = scmp.eq.s32.totalorder %s26, 1
      %p44 = por %p42, %p43
      %p45 = scmp.ne.s32.totalorder %s34, %s35
      %p46 = scmp.eq.s32.totalorder %s26, 0
      %p47 = por %p45, %p46
      %p48 = scmp.ne.s32.totalorder %s34, %s35
      %p49 = scmp.eq.s32.totalorder %s27, 1
      %p50 = por %p48, %p49
      %p52 = scmp.ne.s32.totalorder %s35, %s51
      %p53 = scmp.eq.s32.totalorder %s27, 0
      %p54 = por %p52, %p53
      %s56 = sadd.s32 %s55, 1
      %p59 = scmp.eq.s32.totalorder %s21, 1
      %p60 = scmp.ne.s32.totalorder %s55, %s57
      %p61 = scmp.eq.s32.totalorder %s21, 0
      %p62 = por %p60, %p61
      %p63 = scmp.ne.s32.totalorder %s55, %s57
      %p64 = scmp.eq.s32.totalorder %s26, 1
      %p65 = por %p63, %p64
      %p66 = scmp.ne.s32.totalorder %s57, %s58
      %p67 = scmp.eq.s32.totalorder %s26, 0
      %p68 = por %p66, %p67
      %p69 = scmp.ne.s32.totalorder %s57, %s58
      %p70 = scmp.eq.s32.totalorder %s27, 1
      %p71 = por %p69, %p70
      %p73 = scmp.ne.s32.totalorder %s58, %s72
      %p74 = scmp.eq.s32.totalorder %s27, 0
      %p75 = por %p73, %p74
      %s77 = sadd.s32 %s76, 1
      %p80 = scmp.eq.s32.totalorder %s21, 1
      %p81 = scmp.ne.s32.totalorder %s76, %s78
      %p82 = scmp.eq.s32.totalorder %s21, 0
      %p83 = por %p81, %p82
      %p84 = scmp.ne.s32.totalorder %s76, %s78
      %p85 = scmp.eq.s32.totalorder %s26, 1
      %p86 = por %p84, %p85
      %p87 = scmp.ne.s32.totalorder %s78, %s79
      %p88 = scmp.eq.s32.totalorder %s26, 0
      %p89 = por %p87, %p88
      %p90 = scmp.ne.s32.totalorder %s78, %s79
      %p91 = scmp.eq.s32.totalorder %s27, 1
      %p92 = por %p90, %p91
      %p94 = scmp.ne.s32.totalorder %s79, %s93
      %p95 = scmp.eq.s32.totalorder %s27, 0
      %p96 = por %p94, %p95
      %s97 = ssub.s32 %s21, %s28
      %p98 = scmp.eq.s32.totalorder %s97, 0
      %s100 = sadd.s32 %s99, 1
      %s101 = scalar_select %p98, %s99, %s100
      %p104 = pneg %p98
      %p105 = scmp.eq.s32.totalorder %s21, 1
      %p106 = por %p104, %p105
      %p107 = scmp.ne.s32.totalorder %s99, %s102
      %p108 = scmp.eq.s32.totalorder %s21, 0
      %p109 = por %p107, %p108
      %p110 = scmp.ne.s32.totalorder %s99, %s102
      %p111 = scmp.eq.s32.totalorder %s26, 1
      %p112 = por %p110, %p111
      %p113 = scmp.ne.s32.totalorder %s102, %s103
      %p114 = scmp.eq.s32.totalorder %s26, 0
      %p115 = por %p113, %p114
      %p116 = scmp.ne.s32.totalorder %s102, %s103
      %p117 = scmp.eq.s32.totalorder %s27, 1
      %p118 = por %p116, %p117
      %p120 = scmp.ne.s32.totalorder %s103, %s119
      %p121 = scmp.eq.s32.totalorder %s27, 0
      %p122 = por %p120, %p121
      %s123 = ssub.s32 %s21, %s28
      %p124 = scmp.eq.s32.totalorder %s123, 0
      %s126 = sadd.s32 %s125, 1
      %s127 = scalar_select %p124, %s125, %s126
      %p130 = pneg %p124
      %p131 = scmp.eq.s32.totalorder %s21, 1
      %p132 = por %p130, %p131
      %p133 = scmp.ne.s32.totalorder %s125, %s128
      %p134 = scmp.eq.s32.totalorder %s21, 0
      %p135 = por %p133, %p134
      %p136 = scmp.ne.s32.totalorder %s125, %s128
      %p137 = scmp.eq.s32.totalorder %s26, 1
      %p138 = por %p136, %p137
      %p139 = scmp.ne.s32.totalorder %s128, %s129
      %p140 = scmp.eq.s32.totalorder %s26, 0
      %p141 = por %p139, %p140
      %p142 = scmp.ne.s32.totalorder %s128, %s129
      %p143 = scmp.eq.s32.totalorder %s27, 1
      %p144 = por %p142, %p143
      %p146 = scmp.ne.s32.totalorder %s129, %s145
      %p147 = scmp.eq.s32.totalorder %s27, 0
      %p148 = por %p146, %p147
      %p149 = scmp.le.s32.totalorder 1, %s21
      %p150 = scmp.lt.s32.totalorder %s21, 3
      %p151 = pnand %p149, %p150
      %p152 = pneg %p151
      // Predicated region
      $region9: #{tpu_custom_call.1} parent=5 // pred_check
        _
      $region10: #{tpu_custom_call.1} parent=5 // pred_check_branch
        %154 = sbr.rel (%p151) target = $region12
      $region11: #{tpu_custom_call.1} parent=5 // pred_region
        %s155 = ssub.s32 %s21, 1
        // Predicated region
        $region13: #{tpu_custom_call.1} parent=11 // pred_check
          %p156 = pneg %p68
        $region14: #{tpu_custom_call.1} parent=11 // pred_check_branch
          %158 = sbr.rel (%p156) target = $region16
        $region15: #{tpu_custom_call.1} parent=11 // pred_region
          %160 = vsyncadd [#allocation6], 0
          %s161 = sshll.u32 %s1, 4
          %s162 = int_to_ptr.hbm [resolvable:$true] %s161
          %s163 = sshll.u32 [#allocation5], 4
          %s164 = int_to_ptr.vmem [resolvable:$true] %s163
          %169 = dma.hbm_to_vmem [thread:$0]  %s162, 4096, %s164, [#allocation6], 256, 256, 16
        $region16: #{tpu_custom_call.1} parent=11 // pred_fallthru
          _
        // Predicated region
        $region17: #{tpu_custom_call.1} parent=11 // pred_check
          %p170 = pneg %p89
        $region18: #{tpu_custom_call.1} parent=11 // pred_check_branch
          %172 = sbr.rel (%p170) target = $region20
        $region19: #{tpu_custom_call.1} parent=11 // pred_region
          _
        $region20: #{tpu_custom_call.1} parent=11 // pred_fallthru
          _
      $region12: #{tpu_custom_call.1} parent=5 // pred_fallthru
        _
      %p173 = scmp.lt.s32.totalorder %s21, 2
      // Predicated region
      $region21: #{tpu_custom_call.1} parent=5 // pred_check
        %p174 = pneg %p173
      $region22: #{tpu_custom_call.1} parent=5 // pred_check_branch
        %176 = sbr.rel (%p174) target = $region24
      $region23: #{tpu_custom_call.1} parent=5 // pred_region
        // Predicated region
        $region25: #{tpu_custom_call.1} parent=23 // pred_check
          %p177 = pneg %p41
        $region26: #{tpu_custom_call.1} parent=23 // pred_check_branch
          %179 = sbr.rel (%p177) target = $region28
        $region27: #{tpu_custom_call.1} parent=23 // pred_region
          %s180 = sand.u32 %s31, 1
          %s181 = scalar_lea.sflag [#allocation3], %s180
          %s182 = sand.u32 %s31, 1
          %s183 = smul.addr %s182, 128
          %s184 = scalar_lea.vmem [#allocation2], %s183
          %s185 = smul.u32 16, %s21
          %187 = vsyncadd %s181, 0
          %s188 = smul.addr %s185, 8
          %s189 = scalar_lea.hbm %s0, %s188
          %s190 = sshll.u32 %s189, 4
          %s191 = int_to_ptr.hbm [resolvable:$true] %s190
          %s192 = sshll.u32 %s184, 4
          %s193 = int_to_ptr.vmem [resolvable:$true] %s192
          %198 = dma.hbm_to_vmem [thread:$0]  %s191, 2048, %s193, %s181, 128, 128, 8
        $region28: #{tpu_custom_call.1} parent=23 // pred_fallthru
          _
      $region24: #{tpu_custom_call.1} parent=5 // pred_fallthru
        _
      %p199 = scmp.le.s32.totalorder 1, %s21
      %p200 = scmp.lt.s32.totalorder %s21, 3
      %p201 = pnand %p199, %p200
      %p202 = pneg %p201
      // Predicated region
      $region29: #{tpu_custom_call.1} parent=5 // pred_check
        _
      $region30: #{tpu_custom_call.1} parent=5 // pred_check_branch
        %204 = sbr.rel (%p201) target = $region32
      $region31: #{tpu_custom_call.1} parent=5 // pred_region
        %s205 = ssub.s32 %s21, 1
        %s206 = sand.u32 %s34, 1
        %s207 = scalar_lea.sflag [#allocation3], %s206
        %s208 = sand.u32 %s34, 1
        %s209 = smul.addr %s208, 128
        %s210 = scalar_lea.vmem [#allocation2], %s209
        // Predicated region
        $region33: #{tpu_custom_call.1} parent=31 // pred_check
          %p211 = pneg %p47
        $region34: #{tpu_custom_call.1} parent=31 // pred_check_branch
          %213 = sbr.rel (%p211) target = $region36
        $region35: #{tpu_custom_call.1} parent=31 // pred_region
          %215 = dma.done %s207, 2048
        $region36: #{tpu_custom_call.1} parent=31 // pred_fallthru
          _
        // Predicated region
        $region37: #{tpu_custom_call.1} parent=31 // pred_check
          %p216 = pneg %p68
        $region38: #{tpu_custom_call.1} parent=31 // pred_check_branch
          %218 = sbr.rel (%p216) target = $region40
        $region39: #{tpu_custom_call.1} parent=31 // pred_region
          %220 = dma.done [#allocation6], 4096
        $region40: #{tpu_custom_call.1} parent=31 // pred_fallthru
          _
        %s221 = sand.u32 %s34, 1
        %s222 = scalar_lea.sflag [#allocation3], %s221
        %s223 = sand.u32 %s34, 1
        %s224 = smul.addr %s223, 128
        %s225 = scalar_lea.vmem [#allocation2], %s224
        %p226 = pneg %p47
        %p227 = pneg %p44
        %p228 = pneg %p68
        %p229 = pneg %p65
        %p230 = pneg %p89
        %p231 = pneg %p86
        %p232 = pneg %p115
        %p233 = pneg %p112
        %s234 = sand.u32 %s102, 1
        %s235 = scalar_lea.sflag [#allocation4], %s234
        %s236 = sand.u32 %s102, 1
        %s237 = smul.addr %s236, 64
        %s238 = scalar_lea.vmem [#allocation7], %s237
        %p239 = pneg %p141
        %p240 = pneg %p138
        %s241 = sand.u32 %s128, 1
        %s242 = scalar_lea.sflag [#allocation9], %s241
        %s243 = sand.u32 %s128, 1
        %s244 = smul.addr %s243, 128
        %s245 = scalar_lea.vmem [#allocation8], %s244
        %s246 = smul.u32 16, %s26
        %s247 = smul.u32 16, %s26
        %s248 = smul.u32 16, %s26
        %v249 = vld [vmem:[%s210] sm:$0xff]
        %v250 = vld [vmem:[%s210 + $0x8] sm:$0xff]
        %v251 = vld [vmem:[%s210 + $0x10] sm:$0xff]
        %v252 = vld [vmem:[%s210 + $0x18] sm:$0xff]
        %v253 = vld [vmem:[%s210 + $0x20] sm:$0xff]
        %v254 = vld [vmem:[%s210 + $0x28] sm:$0xff]
        %v255 = vld [vmem:[%s210 + $0x30] sm:$0xff]
        %v256 = vld [vmem:[%s210 + $0x38] sm:$0xff]
        %v257 = vld [vmem:[%s210 + $0x40] sm:$0xff]
        %v258 = vld [vmem:[%s210 + $0x48] sm:$0xff]
        %v259 = vld [vmem:[%s210 + $0x50] sm:$0xff]
        %v260 = vld [vmem:[%s210 + $0x58] sm:$0xff]
        %v261 = vld [vmem:[%s210 + $0x60] sm:$0xff]
        %v262 = vld [vmem:[%s210 + $0x68] sm:$0xff]
        %v263 = vld [vmem:[%s210 + $0x70] sm:$0xff]
        %v264 = vld [vmem:[%s210 + $0x78] sm:$0xff]
        %v265 = vld [vmem:[#allocation5] sm:$0xff]
        %v266 = vld [vmem:[#allocation5 + $0x8] sm:$0xff]
        %v267 = vld [vmem:[#allocation5 + $0x10] sm:$0xff]
        %v268 = vld [vmem:[#allocation5 + $0x18] sm:$0xff]
        %v269 = vld [vmem:[#allocation5 + $0x20] sm:$0xff]
        %v270 = vld [vmem:[#allocation5 + $0x28] sm:$0xff]
        %v271 = vld [vmem:[#allocation5 + $0x30] sm:$0xff]
        %v272 = vld [vmem:[#allocation5 + $0x38] sm:$0xff]
        %v273 = vld [vmem:[#allocation5 + $0x40] sm:$0xff]
        %v274 = vld [vmem:[#allocation5 + $0x48] sm:$0xff]
        %v275 = vld [vmem:[#allocation5 + $0x50] sm:$0xff]
        %v276 = vld [vmem:[#allocation5 + $0x58] sm:$0xff]
        %v277 = vld [vmem:[#allocation5 + $0x60] sm:$0xff]
        %v278 = vld [vmem:[#allocation5 + $0x68] sm:$0xff]
        %v279 = vld [vmem:[#allocation5 + $0x70] sm:$0xff]
        %v280 = vld [vmem:[#allocation5 + $0x78] sm:$0xff]
        %v281 = vld [vmem:[#allocation5 + $0x80] sm:$0xff]
        %v282 = vld [vmem:[#allocation5 + $0x88] sm:$0xff]
        %v283 = vld [vmem:[#allocation5 + $0x90] sm:$0xff]
        %v284 = vld [vmem:[#allocation5 + $0x98] sm:$0xff]
        %v285 = vld [vmem:[#allocation5 + $0xa0] sm:$0xff]
        %v286 = vld [vmem:[#allocation5 + $0xa8] sm:$0xff]
        %v287 = vld [vmem:[#allocation5 + $0xb0] sm:$0xff]
        %v288 = vld [vmem:[#allocation5 + $0xb8] sm:$0xff]
        %v289 = vld [vmem:[#allocation5 + $0xc0] sm:$0xff]
        %v290 = vld [vmem:[#allocation5 + $0xc8] sm:$0xff]
        %v291 = vld [vmem:[#allocation5 + $0xd0] sm:$0xff]
        %v292 = vld [vmem:[#allocation5 + $0xd8] sm:$0xff]
        %v293 = vld [vmem:[#allocation5 + $0xe0] sm:$0xff]
        %v294 = vld [vmem:[#allocation5 + $0xe8] sm:$0xff]
        %v295 = vld [vmem:[#allocation5 + $0xf0] sm:$0xff]
        %v296 = vld [vmem:[#allocation5 + $0xf8] sm:$0xff]
        %297 = vmatpush.msra.mxu0 %v295
        %298 = vmatpush.msra.mxu0 %v293
        %299 = vmatpush.msra.mxu0 %v291
        %300 = vmatpush.msra.mxu0 %v289
        %301 = vmatpush.msra.mxu0 %v287
        %302 = vmatpush.msra.mxu0 %v285
        %303 = vmatpush.msra.mxu0 %v283
        %304 = vmatpush.msra.mxu0 %v281
        %305 = vmatpush.msra.mxu0 %v279
        %306 = vmatpush.msra.mxu0 %v277
        %307 = vmatpush.msra.mxu0 %v275
        %308 = vmatpush.msra.mxu0 %v273
        %309 = vmatpush.msra.mxu0 %v271
        %310 = vmatpush.msra.mxu0 %v269
        %311 = vmatpush.msra.mxu0 %v267
        %312 = vmatpush.msra.mxu0 %v265
        %313 = vmatmul.f32.gmra.mxu0 %v249
        %v314 = vpop.f32.mrf.mxu0
        %v315 = vadd.f32 0.0, %v314
        %316 = vmatmul.f32.gmra.mxu0 %v250
        %v317 = vpop.f32.mrf.mxu0
        %v318 = vadd.f32 0.0, %v317
        %319 = vmatmul.f32.gmra.mxu0 %v251
        %v320 = vpop.f32.mrf.mxu0
        %v321 = vadd.f32 0.0, %v320
        %322 = vmatmul.f32.gmra.mxu0 %v252
        %v323 = vpop.f32.mrf.mxu0
        %v324 = vadd.f32 0.0, %v323
        %325 = vmatmul.f32.gmra.mxu0 %v253
        %v326 = vpop.f32.mrf.mxu0
        %v327 = vadd.f32 0.0, %v326
        %328 = vmatmul.f32.gmra.mxu0 %v254
        %v329 = vpop.f32.mrf.mxu0
        %v330 = vadd.f32 0.0, %v329
        %331 = vmatmul.f32.gmra.mxu0 %v255
        %v332 = vpop.f32.mrf.mxu0
        %v333 = vadd.f32 0.0, %v332
        %334 = vmatmul.f32.gmra.mxu0 %v256
        %v335 = vpop.f32.mrf.mxu0
        %v336 = vadd.f32 0.0, %v335
        %337 = vmatmul.f32.gmra.mxu0 %v257
        %v338 = vpop.f32.mrf.mxu0
        %v339 = vadd.f32 0.0, %v338
        %340 = vmatmul.f32.gmra.mxu0 %v258
        %v341 = vpop.f32.mrf.mxu0
        %v342 = vadd.f32 0.0, %v341
        %343 = vmatmul.f32.gmra.mxu0 %v259
        %v344 = vpop.f32.mrf.mxu0
        %v345 = vadd.f32 0.0, %v344
        %346 = vmatmul.f32.gmra.mxu0 %v260
        %v347 = vpop.f32.mrf.mxu0
        %v348 = vadd.f32 0.0, %v347
        %349 = vmatmul.f32.gmra.mxu0 %v261
        %v350 = vpop.f32.mrf.mxu0
        %v351 = vadd.f32 0.0, %v350
        %352 = vmatmul.f32.gmra.mxu0 %v262
        %v353 = vpop.f32.mrf.mxu0
        %v354 = vadd.f32 0.0, %v353
        %355 = vmatmul.f32.gmra.mxu0 %v263
        %v356 = vpop.f32.mrf.mxu0
        %v357 = vadd.f32 0.0, %v356
        %358 = vmatmul.f32.gmra.mxu0 %v264
        %v359 = vpop.f32.mrf.mxu0
        %v360 = vadd.f32 0.0, %v359
        %361 = vdwg.mxu0
        %362 = vmatpush.msra.mxu0 %v296
        %363 = vmatpush.msra.mxu0 %v294
        %364 = vmatpush.msra.mxu0 %v292
        %365 = vmatpush.msra.mxu0 %v290
        %366 = vmatpush.msra.mxu0 %v288
        %367 = vmatpush.msra.mxu0 %v286
        %368 = vmatpush.msra.mxu0 %v284
        %369 = vmatpush.msra.mxu0 %v282
        %370 = vmatpush.msra.mxu0 %v280
        %371 = vmatpush.msra.mxu0 %v278
        %372 = vmatpush.msra.mxu0 %v276
        %373 = vmatpush.msra.mxu0 %v274
        %374 = vmatpush.msra.mxu0 %v272
        %375 = vmatpush.msra.mxu0 %v270
        %376 = vmatpush.msra.mxu0 %v268
        %377 = vmatpush.msra.mxu0 %v266
        %378 = vmatmul.f32.gmra.mxu0 %v249
        %v379 = vpop.f32.mrf.mxu0
        %v380 = vadd.f32 0.0, %v379
        %381 = vmatmul.f32.gmra.mxu0 %v250
        %v382 = vpop.f32.mrf.mxu0
        %v383 = vadd.f32 0.0, %v382
        %384 = vmatmul.f32.gmra.mxu0 %v251
        %v385 = vpop.f32.mrf.mxu0
        %v386 = vadd.f32 0.0, %v385
        %387 = vmatmul.f32.gmra.mxu0 %v252
        %v388 = vpop.f32.mrf.mxu0
        %v389 = vadd.f32 0.0, %v388
        %390 = vmatmul.f32.gmra.mxu0 %v253
        %v391 = vpop.f32.mrf.mxu0
        %v392 = vadd.f32 0.0, %v391
        %393 = vmatmul.f32.gmra.mxu0 %v254
        %v394 = vpop.f32.mrf.mxu0
        %v395 = vadd.f32 0.0, %v394
        %396 = vmatmul.f32.gmra.mxu0 %v255
        %v397 = vpop.f32.mrf.mxu0
        %v398 = vadd.f32 0.0, %v397
        %399 = vmatmul.f32.gmra.mxu0 %v256
        %v400 = vpop.f32.mrf.mxu0
        %v401 = vadd.f32 0.0, %v400
        %402 = vmatmul.f32.gmra.mxu0 %v257
        %v403 = vpop.f32.mrf.mxu0
        %v404 = vadd.f32 0.0, %v403
        %405 = vmatmul.f32.gmra.mxu0 %v258
        %v406 = vpop.f32.mrf.mxu0
        %v407 = vadd.f32 0.0, %v406
        %408 = vmatmul.f32.gmra.mxu0 %v259
        %v409 = vpop.f32.mrf.mxu0
        %v410 = vadd.f32 0.0, %v409
        %411 = vmatmul.f32.gmra.mxu0 %v260
        %v412 = vpop.f32.mrf.mxu0
        %v413 = vadd.f32 0.0, %v412
        %414 = vmatmul.f32.gmra.mxu0 %v261
        %v415 = vpop.f32.mrf.mxu0
        %v416 = vadd.f32 0.0, %v415
        %417 = vmatmul.f32.gmra.mxu0 %v262
        %v418 = vpop.f32.mrf.mxu0
        %v419 = vadd.f32 0.0, %v418
        %420 = vmatmul.f32.gmra.mxu0 %v263
        %v421 = vpop.f32.mrf.mxu0
        %v422 = vadd.f32 0.0, %v421
        %423 = vmatmul.f32.gmra.mxu0 %v264
        %v424 = vpop.f32.mrf.mxu0
        %v425 = vadd.f32 0.0, %v424
        %426 = vdwg.mxu0
        %v427 = vpack.c.bf16 %v315, %v315
        %v428 = vpack.c.bf16 %v318, %v318
        %v429 = vpack.c.bf16 %v321, %v321
        %v430 = vpack.c.bf16 %v324, %v324
        %v431 = vpack.c.bf16 %v327, %v327
        %v432 = vpack.c.bf16 %v330, %v330
        %v433 = vpack.c.bf16 %v333, %v333
        %v434 = vpack.c.bf16 %v336, %v336
        %v435 = vpack.c.bf16 %v339, %v339
        %v436 = vpack.c.bf16 %v342, %v342
        %v437 = vpack.c.bf16 %v345, %v345
        %v438 = vpack.c.bf16 %v348, %v348
        %v439 = vpack.c.bf16 %v351, %v351
        %v440 = vpack.c.bf16 %v354, %v354
        %v441 = vpack.c.bf16 %v357, %v357
        %v442 = vpack.c.bf16 %v360, %v360
        %443 = vst [vmem:[%s238] sm:$0xf] %v427
        %444 = vst [vmem:[%s238 + $0x4] sm:$0xf] %v428
        %445 = vst [vmem:[%s238 + $0x8] sm:$0xf] %v429
        %446 = vst [vmem:[%s238 + $0xc] sm:$0xf] %v430
        %447 = vst [vmem:[%s238 + $0x10] sm:$0xf] %v431
        %448 = vst [vmem:[%s238 + $0x14] sm:$0xf] %v432
        %449 = vst [vmem:[%s238 + $0x18] sm:$0xf] %v433
        %450 = vst [vmem:[%s238 + $0x1c] sm:$0xf] %v434
        %451 = vst [vmem:[%s238 + $0x20] sm:$0xf] %v435
        %452 = vst [vmem:[%s238 + $0x24] sm:$0xf] %v436
        %453 = vst [vmem:[%s238 + $0x28] sm:$0xf] %v437
        %454 = vst [vmem:[%s238 + $0x2c] sm:$0xf] %v438
        %455 = vst [vmem:[%s238 + $0x30] sm:$0xf] %v439
        %456 = vst [vmem:[%s238 + $0x34] sm:$0xf] %v440
        %457 = vst [vmem:[%s238 + $0x38] sm:$0xf] %v441
        %458 = vst [vmem:[%s238 + $0x3c] sm:$0xf] %v442
        %v459 = vld [vmem:[%s2] sm:$0x1]
        %v461 = vperm.slane %v459, 0
        %v463 = vadd.f32 %v380, %v461
        %v464 = vadd.f32 %v383, %v461
        %v465 = vadd.f32 %v386, %v461
        %v466 = vadd.f32 %v389, %v461
        %v467 = vadd.f32 %v392, %v461
        %v468 = vadd.f32 %v395, %v461
        %v469 = vadd.f32 %v398, %v461
        %v470 = vadd.f32 %v401, %v461
        %v471 = vadd.f32 %v404, %v461
        %v472 = vadd.f32 %v407, %v461
        %v473 = vadd.f32 %v410, %v461
        %v474 = vadd.f32 %v413, %v461
        %v475 = vadd.f32 %v416, %v461
        %v476 = vadd.f32 %v419, %v461
        %v477 = vadd.f32 %v422, %v461
        %v478 = vadd.f32 %v425, %v461
        %479 = vst [vmem:[%s245] sm:$0xff] %v463
        %480 = vst [vmem:[%s245 + $0x8] sm:$0xff] %v464
        %481 = vst [vmem:[%s245 + $0x10] sm:$0xff] %v465
        %482 = vst [vmem:[%s245 + $0x18] sm:$0xff] %v466
        %483 = vst [vmem:[%s245 + $0x20] sm:$0xff] %v467
        %484 = vst [vmem:[%s245 + $0x28] sm:$0xff] %v468
        %485 = vst [vmem:[%s245 + $0x30] sm:$0xff] %v469
        %486 = vst [vmem:[%s245 + $0x38] sm:$0xff] %v470
        %487 = vst [vmem:[%s245 + $0x40] sm:$0xff] %v471
        %488 = vst [vmem:[%s245 + $0x48] sm:$0xff] %v472
        %489 = vst [vmem:[%s245 + $0x50] sm:$0xff] %v473
        %490 = vst [vmem:[%s245 + $0x58] sm:$0xff] %v474
        %491 = vst [vmem:[%s245 + $0x60] sm:$0xff] %v475
        %492 = vst [vmem:[%s245 + $0x68] sm:$0xff] %v476
        %493 = vst [vmem:[%s245 + $0x70] sm:$0xff] %v477
        %494 = vst [vmem:[%s245 + $0x78] sm:$0xff] %v478
        %s495 = sand.u32 %s102, 1
        %s496 = scalar_lea.sflag [#allocation4], %s495
        %s497 = sand.u32 %s102, 1
        %s498 = smul.addr %s497, 64
        %s499 = scalar_lea.vmem [#allocation7], %s498
        %s500 = sand.u32 %s128, 1
        %s501 = scalar_lea.sflag [#allocation9], %s500
        %s502 = sand.u32 %s128, 1
        %s503 = smul.addr %s502, 128
        %s504 = scalar_lea.vmem [#allocation8], %s503
        // Predicated region
        $region41: #{tpu_custom_call.1} parent=31 // pred_check
          %p505 = pneg %p112
        $region42: #{tpu_custom_call.1} parent=31 // pred_check_branch
          %507 = sbr.rel (%p505) target = $region44
        $region43: #{tpu_custom_call.1} parent=31 // pred_region
          %s508 = smul.u32 16, %s26
          %510 = vsyncadd %s496, 0
          %s511 = smul.addr %s508, 4
          %s512 = scalar_lea.hbm %s3, %s511
          %s513 = sshll.u32 %s499, 4
          %s514 = int_to_ptr.vmem [resolvable:$true] %s513
          %s515 = sshll.u32 %s512, 4
          %s516 = int_to_ptr.hbm [resolvable:$true] %s515
          %521 = dma.vmem_to_hbm [thread:$0]  %s514, 1024, %s516, %s496, 64, 64, 4
        $region44: #{tpu_custom_call.1} parent=31 // pred_fallthru
          _
        // Predicated region
        $region45: #{tpu_custom_call.1} parent=31 // pred_check
          %p522 = pneg %p138
        $region46: #{tpu_custom_call.1} parent=31 // pred_check_branch
          %524 = sbr.rel (%p522) target = $region48
        $region47: #{tpu_custom_call.1} parent=31 // pred_region
          %s525 = smul.u32 16, %s26
          %527 = vsyncadd %s501, 0
          %s528 = smul.addr %s525, 8
          %s529 = scalar_lea.hbm %s4, %s528
          %s530 = sshll.u32 %s504, 4
          %s531 = int_to_ptr.vmem [resolvable:$true] %s530
          %s532 = sshll.u32 %s529, 4
          %s533 = int_to_ptr.hbm [resolvable:$true] %s532
          %538 = dma.vmem_to_hbm [thread:$0]  %s531, 2048, %s533, %s501, 128, 128, 8
        $region48: #{tpu_custom_call.1} parent=31 // pred_fallthru
          _
      $region32: #{tpu_custom_call.1} parent=5 // pred_fallthru
        _
      %p539 = scmp.le.s32.totalorder 2, %s21
      // Predicated region
      $region49: #{tpu_custom_call.1} parent=5 // pred_check
        %p540 = pneg %p539
      $region50: #{tpu_custom_call.1} parent=5 // pred_check_branch
        %542 = sbr.rel (%p540) target = $region52
      $region51: #{tpu_custom_call.1} parent=5 // pred_region
        %s543 = ssub.s32 %s21, 2
        // Predicated region
        $region53: #{tpu_custom_call.1} parent=51 // pred_check
          %p544 = pneg %p118
        $region54: #{tpu_custom_call.1} parent=51 // pred_check_branch
          %546 = sbr.rel (%p544) target = $region56
        $region55: #{tpu_custom_call.1} parent=51 // pred_region
          %s547 = sand.u32 %s103, 1
          %s548 = scalar_lea.sflag [#allocation4], %s547
          %s549 = sand.u32 %s103, 1
          %s550 = smul.addr %s549, 64
          %s551 = scalar_lea.vmem [#allocation7], %s550
          %553 = dma.done %s548, 1024
        $region56: #{tpu_custom_call.1} parent=51 // pred_fallthru
          _
        // Predicated region
        $region57: #{tpu_custom_call.1} parent=51 // pred_check
          %p554 = pneg %p144
        $region58: #{tpu_custom_call.1} parent=51 // pred_check_branch
          %556 = sbr.rel (%p554) target = $region60
        $region59: #{tpu_custom_call.1} parent=51 // pred_region
          %s557 = sand.u32 %s129, 1
          %s558 = scalar_lea.sflag [#allocation9], %s557
          %s559 = sand.u32 %s129, 1
          %s560 = smul.addr %s559, 128
          %s561 = scalar_lea.vmem [#allocation8], %s560
          %563 = dma.done %s558, 2048
        $region60: #{tpu_custom_call.1} parent=51 // pred_fallthru
          _
      $region52: #{tpu_custom_call.1} parent=5 // pred_fallthru
        _
    $region6: #{tpu_custom_call.1} parent=1 // loop_footer
      %s25 = sadd.s32 1, %s21
    $region7: #{tpu_custom_call.1} parent=1 // loop_footer_branch
      %20 = sbr.rel target = $region3
    $region8: #{tpu_custom_call.1} parent=1 // loop_exit
      _
    %564 = vsyncpa [#allocation3], 1
    %s565 = scalar_lea.sflag [#allocation3], 1
    %566 = vsyncpa %s565, 1
    %567 = vsyncpa [#allocation6], 1
    %568 = vsyncpa [#allocation4], 1
    %s569 = scalar_lea.sflag [#allocation4], 1
    %570 = vsyncpa %s569, 1
    %571 = vsyncpa [#allocation9], 1
    %s572 = scalar_lea.sflag [#allocation9], 1
    %573 = vsyncpa %s572, 1

</llo_original>
